<compile_context>
chip_gen: v7x
topology: tpu7x:2x2x1
jax: 0.10.0
libtpu: 0.0.40
codegen_flags: <defaults>
</compile_context>

<pallas_src>
import functools

import jax
import jax.numpy as jnp
from jax import lax
from jax.experimental import pallas as pl
from jax.experimental.pallas import tpu as pltpu

LANES = 128
SUBLANES = 8


def _rmsle_partial_kernel(pred_ref, act_ref, out_ref, *,
                          n_rows, block_rows, steps, needs_mask):
    """Accumulate (8, 128) per-(sublane, lane) partial sums of (log diff)^2.

    pred_ref / act_ref : VMEM tiles (block_rows, 128), native input dtype
    out_ref            : VMEM (8, 128) f32 partial sums, resident across the
                         step axis (same output block index for every step).
    """
    s = pl.program_id(1)

    @pl.when(s == 0)
    def _():
        out_ref[...] = jnp.zeros_like(out_ref)

    p = pred_ref[...].astype(jnp.float32)
    a = act_ref[...].astype(jnp.float32)
    # Matches the PyTorch module literally (log(x + 1), not log1p).
    d = jnp.log(p + 1.0) - jnp.log(a + 1.0)
    sq = d * d

    def accumulate(vals):
        # Vreg-aligned VPU adds over groups of 8 sublanes; the cross-sublane /
        # cross-lane reduce is deferred to the JAX wrapper so the loop-carried
        # path never touches the XLU.
        out_ref[...] += jnp.sum(
            vals.reshape(block_rows // SUBLANES, SUBLANES, LANES), axis=0)

    if needs_mask:
        row0 = (pl.program_id(0) * steps + s) * block_rows
        is_tail = row0 + block_rows > n_rows

        @pl.when(jnp.logical_not(is_tail))
        def _():
            accumulate(sq)

        @pl.when(is_tail)
        def _():
            # Only the overhanging block pays for the iota + compare + select.
            # Masking `sq` (post-log) is safe: any NaN/inf produced by log of
            # clamped / unspecified out-of-range data lands only in positions
            # the elementwise select replaces with 0.0.  Do NOT move this mask
            # after the accumulate.
            ridx = row0 + lax.broadcasted_iota(jnp.int32, (block_rows, LANES), 0)
            accumulate(jnp.where(ridx < n_rows, sq, 0.0))
    else:
        accumulate(sq)


def rmsle_loss(pred, actual, *, target_tile_bytes=4 << 20):
    """Pallas RMSLE loss, semantics-equal to the PyTorch RMSLELoss module."""
    assert pred.shape == actual.shape, "pred/actual must have identical shapes"
    n = pred.size
    itemsize = jnp.dtype(pred.dtype).itemsize

    # Flatten in native dtype (no host-side astype copy; the kernel casts).
    p = jnp.ravel(pred)
    a = jnp.ravel(actual)

    # Lane + sublane alignment.  Zero padding is exact for this loss:
    # log(0 + 1) - log(0 + 1) == 0; we divide by the true element count.
    sub = max(SUBLANES, 32 // itemsize)          # 8 f32, 16 bf16, 32 int8
    rows = pl.cdiv(pl.cdiv(n, LANES), sub) * sub
    pad = rows * LANES - n
    if pad:
        p = jnp.pad(p, (0, pad))
        a = jnp.pad(a, (0, pad))
    p = p.reshape(rows, LANES)
    a = a.reshape(rows, LANES)

    # Tile size: ~4 MiB per input per pipeline buffer (8192 rows for f32,
    # 16384 for bf16).  2 inputs x 2 buffers x 4 MiB = 16 MiB total, safe on
    # v5e/v6e/v7x with the explicit 32 MiB scoped-VMEM limit below.
    block_rows = max(sub, (target_tile_bytes // (LANES * itemsize)) // 32 * 32)
    if rows <= block_rows:
        block_rows = rows                        # full dim -> always legal

    total_steps = pl.cdiv(rows, block_rows)

    # Megacore: split the step range across 2 cores whenever there are >= 2
    # steps (engages v7x's second TensorCore; harmless sequential loop on
    # v5e/v6e).  Uneven splits rely on the in-kernel mask to zero the
    # clamped/duplicated tail block.
    n_split = 2 if total_steps >= 2 else 1
    steps = pl.cdiv(total_steps, n_split)
    needs_mask = (n_split * steps * block_rows) > rows

    last_block = total_steps - 1
    in_map = lambda c, s: (jnp.minimum(c * steps + s, last_block), 0)

    cost = pl.CostEstimate(
        flops=5 * n,                             # +1, +1, -, square, accumulate
        transcendentals=2 * n,                   # two logs per element
        bytes_accessed=2 * rows * LANES * itemsize + n_split * SUBLANES * LANES * 4,
    )

    kernel = functools.partial(
        _rmsle_partial_kernel,
        n_rows=rows, block_rows=block_rows, steps=steps, needs_mask=needs_mask)

    partials = pl.pallas_call(
        kernel,
        out_shape=jax.ShapeDtypeStruct((n_split * SUBLANES, LANES), jnp.float32),
        grid_spec=pltpu.PrefetchScalarGridSpec(
            num_scalar_prefetch=0,
            grid=(n_split, steps),
            in_specs=[
                pl.BlockSpec((block_rows, LANES), in_map),
                pl.BlockSpec((block_rows, LANES), in_map),
            ],
            out_specs=pl.BlockSpec((SUBLANES, LANES), lambda c, s: (c, 0)),
        ),
        compiler_params=pltpu.CompilerParams(
            dimension_semantics=("parallel", "arbitrary"),
            vmem_limit_bytes=32 << 20,           # 16 MiB streaming footprint + headroom
        ),
        cost_estimate=cost,
    )(p, a)

    # Tiny final combine across cores/sublanes/lanes + mean + sqrt.
    return jnp.sqrt(jnp.sum(partials, dtype=jnp.float32) / jnp.float32(n))


if __name__ == "__main__":
    key = jax.random.PRNGKey(0)
    k1, k2 = jax.random.split(key)

    # Small NCHW-shaped inputs (autoencoder reconstruction vs. target).
    shape = (2, 4, 16, 16)
    # Positive values so log(x + 1) is well-defined, as the module assumes.
    pred = jax.random.uniform(k1, shape, dtype=jnp.float32, minval=0.0, maxval=5.0)
    actual = jax.random.uniform(k2, shape, dtype=jnp.float32, minval=0.0, maxval=5.0)

    loss = jax.block_until_ready(rmsle_loss(pred, actual))

    # Pure-JAX reference check of the PyTorch semantics.
    ref = jnp.sqrt(jnp.mean((jnp.log(pred + 1.0) - jnp.log(actual + 1.0)) ** 2))
    assert jnp.allclose(loss, ref, rtol=1e-5, atol=1e-6), (loss, ref)

    print("KERNEL_OK")
</pallas_src>

<mosaic_0001>
module attributes {stable_mosaic.version = 11 : i64} {
  func.func @_rmsle_partial_kernel(%arg0: i32, %arg1: i32, %arg2: memref<16x128xf32, #tpu.memory_space<vmem>>, %arg3: memref<16x128xf32, #tpu.memory_space<vmem>>, %arg4: memref<8x128xf32, #tpu.memory_space<vmem>>) attributes {dimension_semantics = [#tpu.dimension_semantics<parallel>, #tpu.dimension_semantics<arbitrary>], iteration_bounds = array<i64: 1, 1>, scalar_prefetch = 0 : i64, scratch_operands = 0 : i64, tpu.core_type = #tpu.core_type<tc>, window_params = [{transform_indices = @transform_0, window_bounds = array<i64: 16, 128>}, {transform_indices = @transform_1, window_bounds = array<i64: 16, 128>}, {transform_indices = @transform_2, window_bounds = array<i64: 8, 128>}]} {
    %c0_i32 = arith.constant 0 : i32
    %0 = arith.cmpi eq, %arg1, %c0_i32 : i32
    %1 = arith.extui %0 : i1 to i32
    %c0_i32_0 = arith.constant 0 : i32
    %2 = arith.cmpi ne, %1, %c0_i32_0 : i32
    scf.if %2 {
      %cst_10 = arith.constant 0.000000e+00 : f32
      %18 = vector.broadcast %cst_10 : f32 to vector<8x128xf32>
      %c0_11 = arith.constant 0 : index
      %c0_12 = arith.constant 0 : index
      %19 = vector.load %arg4[%c0_11, %c0_12] : memref<8x128xf32, #tpu.memory_space<vmem>>, vector<8x128xf32>
      tpu.vector_store %arg4[%c0_11, %c0_12], %18 {strides = array<i32>} : memref<8x128xf32, #tpu.memory_space<vmem>>, vector<8x128xf32>,
    } else {
    }
    %c0 = arith.constant 0 : index
    %c0_1 = arith.constant 0 : index
    %3 = vector.load %arg2[%c0, %c0_1] : memref<16x128xf32, #tpu.memory_space<vmem>>, vector<16x128xf32>
    %c0_2 = arith.constant 0 : index
    %c0_3 = arith.constant 0 : index
    %4 = vector.load %arg3[%c0_2, %c0_3] : memref<16x128xf32, #tpu.memory_space<vmem>>, vector<16x128xf32>
    %cst = arith.constant 1.000000e+00 : f32
    %5 = vector.broadcast %cst : f32 to vector<16x128xf32>
    %6 = arith.addf %3, %5 : vector<16x128xf32>
    %7 = math.log %6 : vector<16x128xf32>
    %cst_4 = arith.constant 1.000000e+00 : f32
    %8 = vector.broadcast %cst_4 : f32 to vector<16x128xf32>
    %9 = arith.addf %4, %8 : vector<16x128xf32>
    %10 = math.log %9 : vector<16x128xf32>
    %11 = arith.subf %7, %10 : vector<16x128xf32>
    %12 = arith.mulf %11, %11 : vector<16x128xf32>
    %c0_5 = arith.constant 0 : index
    %c0_6 = arith.constant 0 : index
    %13 = vector.load %arg4[%c0_5, %c0_6] : memref<8x128xf32, #tpu.memory_space<vmem>>, vector<8x128xf32>
    %14 = vector.shape_cast %12 : vector<16x128xf32> to vector<2x8x128xf32>
    %cst_7 = arith.constant dense<0.000000e+00> : vector<8x128xf32>
    %15 = vector.multi_reduction <add>, %14, %cst_7 [0] : vector<2x8x128xf32> to vector<8x128xf32>
    %16 = arith.addf %13, %15 : vector<8x128xf32>
    %c0_8 = arith.constant 0 : index
    %c0_9 = arith.constant 0 : index
    %17 = vector.load %arg4[%c0_8, %c0_9] : memref<8x128xf32, #tpu.memory_space<vmem>>, vector<8x128xf32>
    tpu.vector_store %arg4[%c0_8, %c0_9], %16 {strides = array<i32>} : memref<8x128xf32, #tpu.memory_space<vmem>>, vector<8x128xf32>,
    return
  }
  func.func @transform_0(%arg0: i32, %arg1: i32) -> (i32, i32) {
    %c1_i32 = arith.constant 1 : i32
    %0 = arith.muli %arg0, %c1_i32 : i32
    %1 = arith.addi %0, %arg1 : i32
    %c0_i32 = arith.constant 0 : i32
    %2 = arith.minsi %1, %c0_i32 : i32
    %c0_i32_0 = arith.constant 0 : i32
    %c0_i32_1 = arith.constant 0 : i32
    return %2, %c0_i32_0 : i32, i32
  }
  func.func @transform_1(%arg0: i32, %arg1: i32) -> (i32, i32) {
    %c1_i32 = arith.constant 1 : i32
    %0 = arith.muli %arg0, %c1_i32 : i32
    %1 = arith.addi %0, %arg1 : i32
    %c0_i32 = arith.constant 0 : i32
    %2 = arith.minsi %1, %c0_i32 : i32
    %c0_i32_0 = arith.constant 0 : i32
    %c0_i32_1 = arith.constant 0 : i32
    return %2, %c0_i32_0 : i32, i32
  }
  func.func @transform_2(%arg0: i32, %arg1: i32) -> (i32, i32) {
    %c0_i32 = arith.constant 0 : i32
    %c0_i32_0 = arith.constant 0 : i32
    return %arg0, %c0_i32 : i32, i32
  }
}

</mosaic_0001>

<llo_original>
// kernel: tpu_custom_call.1
$region0: #{tpu_custom_call.1}
  #allocation0 [shape = 'u32[]', space=smem, size = 0x4, offset = 0x4, fixed_abs, tag = 'smem constant byte address 0x4 - core index']
  #allocation1 [shape = 'u32[144,128]{1,0:T(1,128)}', space=vmem, size = 0x12000, scoped, tag = 'internal scratch']
  %s0 = inlined_call_operand.hbm [shape: f32[16,128], index: 0, kind: input, shape index: {}]
  %s1 = inlined_call_operand.hbm [shape: f32[16,128], index: 1, kind: input, shape index: {}]
  %s2 = inlined_call_operand.hbm [shape: f32[8,128], index: 2, kind: output, shape index: {}]
  %s3 = sld [smem:[#allocation0]]
  $region30: #{tpu_custom_call.1} parent=0
    _
  %s5 = ssub.s32 1, %s3
  %s6 = scalar_select 0, %s5, %s3
  $region1: #{tpu_custom_call.1} parent=0
    #allocation2 [shape = 'u8[8192]{0}', space=vmem, size = 0x2000, scoped, tag = 'input window, operand 0, single buffered']
    #allocation3 [shape = 's32[1]{0}', space=sflag, size = 0x4, scoped, tag = 'scoped memory for tpu_custom_call.1']
    #allocation4 [shape = 's32[1]{0}', space=sflag, size = 0x4, scoped, tag = 'scoped memory for tpu_custom_call.1']
    #allocation5 [shape = 'u8[8192]{0}', space=vmem, size = 0x2000, scoped, tag = 'input window, operand 1, single buffered']
    #allocation6 [shape = 's32[1]{0}', space=sflag, size = 0x4, scoped, tag = 'scoped memory for tpu_custom_call.1']
    #allocation7 [shape = 'u8[4096]{0}', space=vmem, size = 0x1000, scoped, tag = 'output window, operand 0, single buffered']
    %7 = vsyncpa [#allocation3], 0
    %8 = vsyncpa [#allocation6], 0
    %9 = vsyncpa [#allocation4], 0
    // Predicated region
    $region2: #{tpu_custom_call.1} parent=1 // pred_check
      _
    $region3: #{tpu_custom_call.1} parent=1 // pred_check_branch
      %11 = sbr.rel (0) target = $region5
    $region4: #{tpu_custom_call.1} parent=1 // pred_region
      %s12 = sadd.s32 0, 0
      %p13 = scmp.lt.s32.totalorder %s12, 0
      %s14 = scalar_select %p13, %s12, 0
      %s15 = smul.u32 2, %s14
      %s17 = ssub.s32 256, 256
      %18 = vsyncadd [#allocation3], %s17
      %s19 = smul.addr %s15, 128
      %s20 = scalar_lea.hbm %s0, %s19
      %s21 = sshll.u32 [#allocation2], 4
      %s22 = int_to_ptr.vmem [resolvable:$true] %s21
      %27 = dma.hbm_to_vmem [thread:$0]  %s20, 256, %s22, [#allocation3], 128, 128, 8
    $region5: #{tpu_custom_call.1} parent=1 // pred_fallthru
      _
    // Predicated region
    $region6: #{tpu_custom_call.1} parent=1 // pred_check
      _
    $region7: #{tpu_custom_call.1} parent=1 // pred_check_branch
      %29 = sbr.rel (0) target = $region9
    $region8: #{tpu_custom_call.1} parent=1 // pred_region
      %s30 = sadd.s32 0, 0
      %p31 = scmp.lt.s32.totalorder %s30, 0
      %s32 = scalar_select %p31, %s30, 0
      %s33 = smul.u32 2, %s32
      %s35 = ssub.s32 256, 256
      %36 = vsyncadd [#allocation6], %s35
      %s37 = smul.addr %s33, 128
      %s38 = scalar_lea.hbm %s1, %s37
      %s39 = sshll.u32 [#allocation5], 4
      %s40 = int_to_ptr.vmem [resolvable:$true] %s39
      %45 = dma.hbm_to_vmem [thread:$0]  %s38, 256, %s40, [#allocation6], 128, 128, 8
    $region9: #{tpu_custom_call.1} parent=1 // pred_fallthru
      _
    // Predicated region
    $region10: #{tpu_custom_call.1} parent=1 // pred_check
      _
    $region11: #{tpu_custom_call.1} parent=1 // pred_check_branch
      %47 = sbr.rel (0) target = $region13
    $region12: #{tpu_custom_call.1} parent=1 // pred_region
      %48 = dma.done [#allocation3], 256
    $region13: #{tpu_custom_call.1} parent=1 // pred_fallthru
      _
    // Predicated region
    $region14: #{tpu_custom_call.1} parent=1 // pred_check
      _
    $region15: #{tpu_custom_call.1} parent=1 // pred_check_branch
      %50 = sbr.rel (0) target = $region17
    $region16: #{tpu_custom_call.1} parent=1 // pred_region
      %51 = dma.done [#allocation6], 256
    $region17: #{tpu_custom_call.1} parent=1 // pred_fallthru
      _
    %s52 = sadd.s32 0, 0
    %p53 = scmp.lt.s32.totalorder %s52, 0
    %s54 = scalar_select %p53, %s52, 0
    %s55 = smul.u32 2, %s54
    %s56 = sadd.s32 0, 0
    %p57 = scmp.lt.s32.totalorder %s56, 0
    %s58 = scalar_select %p57, %s56, 0
    %s59 = smul.u32 2, %s58
    %p60 = scmp.eq.s32.totalorder 0, 0
    // Predicated region
    $region18: #{tpu_custom_call.1} parent=1 // pred_check
      %p61 = pneg %p60
    $region19: #{tpu_custom_call.1} parent=1 // pred_check_branch
      %63 = sbr.rel (%p61) target = $region21
    $region20: #{tpu_custom_call.1} parent=1 // pred_region
      %64 = vst [vmem:[#allocation7] sm:$0xff] 0.0
    $region21: #{tpu_custom_call.1} parent=1 // pred_fallthru
      _
    %v65 = vld [vmem:[#allocation2] sm:$0xff]
    %v66 = vld [vmem:[#allocation2 + $0x8] sm:$0xff]
    %v67 = vld [vmem:[#allocation5] sm:$0xff]
    %v68 = vld [vmem:[#allocation5 + $0x8] sm:$0xff]
    %v69 = vadd.f32 %v65, 1.0
    %v70 = vadd.f32 %v66, 1.0
    %v71 = vlog2.pop %v69
    %v72 = vmul.f32 %v71, 0.6931472
    %v73 = vlog2.pop %v70
    %v74 = vmul.f32 %v73, 0.6931472
    %v75 = vadd.f32 %v67, 1.0
    %v76 = vadd.f32 %v68, 1.0
    %v77 = vlog2.pop %v75
    %v78 = vmul.f32 %v77, 0.6931472
    %v79 = vlog2.pop %v76
    %v80 = vmul.f32 %v79, 0.6931472
    %v81 = vsub.f32 %v72, %v78
    %v82 = vsub.f32 %v74, %v80
    %v83 = vmul.f32 %v81, %v81
    %v84 = vmul.f32 %v82, %v82
    %v85 = vld [vmem:[#allocation7] sm:$0xff]
    %v86 = vadd.f32 %v83, %v84
    %v87 = vadd.f32 %v85, %v86
    %88 = vst [vmem:[#allocation7] sm:$0xff] %v87
    // Predicated region
    $region22: #{tpu_custom_call.1} parent=1 // pred_check
      _
    $region23: #{tpu_custom_call.1} parent=1 // pred_check_branch
      %90 = sbr.rel (0) target = $region25
    $region24: #{tpu_custom_call.1} parent=1 // pred_region
      %s92 = ssub.s32 128, 128
      %93 = vsyncadd [#allocation4], %s92
      %s95 = sshll.u32 [#allocation7], 4
      %s96 = int_to_ptr.vmem [resolvable:$true] %s95
      %98 = dma.vmem_to_hbm [thread:$0]  %s96, 128, %s2, [#allocation4]
    $region25: #{tpu_custom_call.1} parent=1 // pred_fallthru
      _
    // Predicated region
    $region26: #{tpu_custom_call.1} parent=1 // pred_check
      _
    $region27: #{tpu_custom_call.1} parent=1 // pred_check_branch
      %100 = sbr.rel (0) target = $region29
    $region28: #{tpu_custom_call.1} parent=1 // pred_region
      %101 = dma.done [#allocation4], 128
    $region29: #{tpu_custom_call.1} parent=1 // pred_fallthru
      _
    %102 = vsyncpa [#allocation3], 1
    %103 = vsyncpa [#allocation6], 1
    %104 = vsyncpa [#allocation4], 1

</llo_original>
